<compile_context>
chip_gen: v5e
topology: v5e:2x2
jax: 0.10.0
libtpu: 0.0.40
codegen_flags: <defaults>
</compile_context>

<pallas_src>
import jax
import jax.numpy as jnp
from jax.experimental import pallas as pl
from jax.experimental.pallas import tpu as pltpu


def _identity_kernel(x_ref, o_ref):
    # Pure copy: one VMEM load + one VMEM store per tile.
    o_ref[...] = x_ref[...]


_LANE = 128
# Inputs at or below this size use the grid-less single-block path.
_SMALL_BYTES = 2 * 1024 * 1024
# Target per-block size for the tiled path (~4 MiB).  Input + output, each
# double-buffered by the pipeline, is ~16 MiB live VMEM.
_TARGET_BLOCK_BYTES = 4 * 1024 * 1024
_VMEM_LIMIT_BYTES = 32 * 1024 * 1024


def _identity_single_block(x: jax.Array) -> jax.Array:
    """Whole-array copy in one shot (no grid)."""
    orig_shape = x.shape
    # TPU vector memory wants >= 2D; reshapes of contiguous data are free.
    x2 = x.reshape(1, -1) if x.ndim < 2 else x

    out = pl.pallas_call(
        _identity_kernel,
        out_shape=jax.ShapeDtypeStruct(x2.shape, x2.dtype),
        in_specs=[pl.BlockSpec(memory_space=pltpu.MemorySpace.VMEM)],
        out_specs=pl.BlockSpec(memory_space=pltpu.MemorySpace.VMEM),
        compiler_params=pltpu.CompilerParams(
            vmem_limit_bytes=_VMEM_LIMIT_BYTES),
        cost_estimate=pl.CostEstimate(
            flops=0, transcendentals=0,
            bytes_accessed=2 * x.size * x.dtype.itemsize),
    )(x2)
    return out.reshape(orig_shape)


def _identity_tiled(x: jax.Array) -> jax.Array:
    """Large inputs: flatten to a lane-dense 2D slab, copy in ~4 MiB blocks."""
    orig_shape = x.shape
    total = x.size
    itemsize = x.dtype.itemsize

    # Widest lane-dense column count (multiple of 128, power-of-two factor)
    # that divides the flat size exactly -> no padding; the reshape below is a
    # free metadata op and every store is a full unmasked `vst`.
    cols = _LANE
    for cand in (_LANE * 64, _LANE * 32, _LANE * 16, _LANE * 8,
                 _LANE * 4, _LANE * 2, _LANE):
        if total % cand == 0:
            cols = cand
            break
    rows = total // cols

    # Minimum sublane multiple so packed dtypes stay on their native tile:
    # f32 -> 8, bf16 -> 16, int8/fp8 -> 32.
    min_sub = max(8, 32 // itemsize)
    tile_rows = max(min_sub, _TARGET_BLOCK_BYTES // (cols * itemsize))
    tile_rows = (tile_rows // min_sub) * min_sub
    tile_rows = min(tile_rows, rows)  # full-dim block is always legal

    x2d = x.reshape(rows, cols)
    grid = (pl.cdiv(rows, tile_rows),)  # ragged last block handled by Pallas

    out2d = pl.pallas_call(
        _identity_kernel,
        out_shape=jax.ShapeDtypeStruct((rows, cols), x.dtype),
        grid=grid,
        in_specs=[pl.BlockSpec((tile_rows, cols), lambda i: (i, 0))],
        out_specs=pl.BlockSpec((tile_rows, cols), lambda i: (i, 0)),
        compiler_params=pltpu.CompilerParams(
            # "parallel" lets Mosaic shard row-blocks across the 2 TCs on v7x.
            dimension_semantics=("parallel",),
            vmem_limit_bytes=_VMEM_LIMIT_BYTES,
        ),
        cost_estimate=pl.CostEstimate(
            flops=0, transcendentals=0, bytes_accessed=2 * total * itemsize),
        # NOTE: input_output_aliases={0: 0} would halve HBM traffic by donating
        # x's buffer, but callers (and the test below) still read x afterwards,
        # so we keep a fresh output buffer.
    )(x2d)

    return out2d.reshape(orig_shape)


def identity(x: jax.Array) -> jax.Array:
    """Identity forward: returns a tensor equal to x (same shape/dtype)."""
    if x.size == 0:
        return x
    total_bytes = x.size * x.dtype.itemsize
    if total_bytes <= _SMALL_BYTES or x.size % _LANE != 0:
        if total_bytes > 8 * 1024 * 1024:
            # TODO(synk): huge inputs whose flat size is not a multiple of 128
            # have no clean lane-dense tiling; Identity is a semantic no-op,
            # so pass the array through (zero HBM traffic — strictly optimal).
            return x
        return _identity_single_block(x)
    return _identity_tiled(x)


if __name__ == "__main__":
    key = jax.random.PRNGKey(0)
    # NCHW input, consistent with PyTorch conv-style test inputs.
    x = jax.random.normal(key, (2, 4, 16, 16), dtype=jnp.float32)

    y = jax.block_until_ready(identity(x))          # small / single-block path
    assert y.shape == x.shape and y.dtype == x.dtype
    assert bool(jnp.all(y == x))

    # Also exercise the tiled large-input path (8 MiB f32 -> 2 grid steps).
    x_big = jax.random.normal(jax.random.PRNGKey(1), (8, 64, 64, 64),
                              dtype=jnp.float32)
    y_big = jax.block_until_ready(identity(x_big))
    assert y_big.shape == x_big.shape and y_big.dtype == x_big.dtype
    assert bool(jnp.all(y_big == x_big))

    print("KERNEL_OK")
</pallas_src>

<mosaic_0001>
module attributes {stable_mosaic.version = 11 : i64} {
  func.func @_identity_kernel(%arg0: memref<2x4x16x16xf32, #tpu.memory_space<vmem>>, %arg1: memref<2x4x16x16xf32, #tpu.memory_space<vmem>>) attributes {dimension_semantics = [], scalar_prefetch = 0 : i64, scratch_operands = 0 : i64, tpu.core_type = #tpu.core_type<tc>} {
    %c0 = arith.constant 0 : index
    %c0_0 = arith.constant 0 : index
    %c0_1 = arith.constant 0 : index
    %c0_2 = arith.constant 0 : index
    %0 = vector.load %arg0[%c0, %c0_0, %c0_1, %c0_2] : memref<2x4x16x16xf32, #tpu.memory_space<vmem>>, vector<2x4x16x16xf32>
    %c0_3 = arith.constant 0 : index
    %c0_4 = arith.constant 0 : index
    %c0_5 = arith.constant 0 : index
    %c0_6 = arith.constant 0 : index
    %1 = vector.load %arg1[%c0_3, %c0_4, %c0_5, %c0_6] : memref<2x4x16x16xf32, #tpu.memory_space<vmem>>, vector<2x4x16x16xf32>
    tpu.vector_store %arg1[%c0_3, %c0_4, %c0_5, %c0_6], %0 {strides = array<i32>} : memref<2x4x16x16xf32, #tpu.memory_space<vmem>>, vector<2x4x16x16xf32>,
    return
  }
}

</mosaic_0001>

<llo_original>
// kernel: tpu_custom_call.1
$region0: #{tpu_custom_call.1}
  #allocation0 [shape = 'u32[]', space=smem, size = 0x4, offset = 0x4, fixed_abs, tag = 'smem constant byte address 0x4 - core index']
  #allocation1 [shape = 'u32[72,128]{1,0:T(1,128)}', space=vmem, size = 0x9000, scoped, tag = 'internal scratch']
  %s0 = inlined_call_operand.hbm [shape: f32[2,4,16,16], index: 0, kind: input, shape index: {}]
  %s1 = inlined_call_operand.hbm [shape: f32[2,4,16,16], index: 1, kind: output, shape index: {}]
  %s2 = sld [smem:[#allocation0]]
  $region18: #{tpu_custom_call.1} parent=0
    _
  %s4 = ssub.s32 1, %s2
  %s5 = scalar_select 0, %s4, %s2
  $region1: #{tpu_custom_call.1} parent=0
    #allocation2 [shape = 'u8[65536]{0}', space=vmem, size = 0x10000, scoped, tag = 'input window, operand 0, single buffered']
    #allocation3 [shape = 's32[1]{0}', space=sflag, size = 0x4, scoped, tag = 'scoped memory for tpu_custom_call.1']
    #allocation4 [shape = 's32[1]{0}', space=sflag, size = 0x4, scoped, tag = 'scoped memory for tpu_custom_call.1']
    #allocation5 [shape = 'u8[65536]{0}', space=vmem, size = 0x10000, scoped, tag = 'output window, operand 0, single buffered']
    %6 = vsyncpa [#allocation3], 0
    %7 = vsyncpa [#allocation4], 0
    // Predicated region
    $region2: #{tpu_custom_call.1} parent=1 // pred_check
      _
    $region3: #{tpu_custom_call.1} parent=1 // pred_check_branch
      %9 = sbr.rel (0) target = $region5
    $region4: #{tpu_custom_call.1} parent=1 // pred_region
      %11 = vsyncadd [#allocation3], 0
      %s12 = sshll.u32 %s0, 4
      %s13 = int_to_ptr.hbm [resolvable:$true] %s12
      %s14 = sshll.u32 [#allocation2], 4
      %s15 = int_to_ptr.vmem [resolvable:$true] %s14
      %20 = dma.hbm_to_vmem [thread:$0]  %s13, 2048, %s15, [#allocation3], 128, 128, 8
    $region5: #{tpu_custom_call.1} parent=1 // pred_fallthru
      _
    // Predicated region
    $region6: #{tpu_custom_call.1} parent=1 // pred_check
      _
    $region7: #{tpu_custom_call.1} parent=1 // pred_check_branch
      %22 = sbr.rel (0) target = $region9
    $region8: #{tpu_custom_call.1} parent=1 // pred_region
      %24 = dma.done [#allocation3], 2048
    $region9: #{tpu_custom_call.1} parent=1 // pred_fallthru
      _
    %v25 = vld [vmem:[#allocation2] sm:$0xff]
    %v26 = vld [vmem:[#allocation2 + $0x8] sm:$0xff]
    %v27 = vld [vmem:[#allocation2 + $0x10] sm:$0xff]
    %v28 = vld [vmem:[#allocation2 + $0x18] sm:$0xff]
    %v29 = vld [vmem:[#allocation2 + $0x20] sm:$0xff]
    %v30 = vld [vmem:[#allocation2 + $0x28] sm:$0xff]
    %v31 = vld [vmem:[#allocation2 + $0x30] sm:$0xff]
    %v32 = vld [vmem:[#allocation2 + $0x38] sm:$0xff]
    %v33 = vld [vmem:[#allocation2 + $0x40] sm:$0xff]
    %v34 = vld [vmem:[#allocation2 + $0x48] sm:$0xff]
    %v35 = vld [vmem:[#allocation2 + $0x50] sm:$0xff]
    %v36 = vld [vmem:[#allocation2 + $0x58] sm:$0xff]
    %v37 = vld [vmem:[#allocation2 + $0x60] sm:$0xff]
    %v38 = vld [vmem:[#allocation2 + $0x68] sm:$0xff]
    %v39 = vld [vmem:[#allocation2 + $0x70] sm:$0xff]
    %v40 = vld [vmem:[#allocation2 + $0x78] sm:$0xff]
    %vm41 = vcmask 130048
    %42 = vst.msk [vmem:[#allocation5] sm:$0xff] %vm41, %v25
    %43 = vst.msk [vmem:[#allocation5 + $0x8] sm:$0xff] %vm41, %v26
    %44 = vst.msk [vmem:[#allocation5 + $0x10] sm:$0xff] %vm41, %v27
    %45 = vst.msk [vmem:[#allocation5 + $0x18] sm:$0xff] %vm41, %v28
    %46 = vst.msk [vmem:[#allocation5 + $0x20] sm:$0xff] %vm41, %v29
    %47 = vst.msk [vmem:[#allocation5 + $0x28] sm:$0xff] %vm41, %v30
    %48 = vst.msk [vmem:[#allocation5 + $0x30] sm:$0xff] %vm41, %v31
    %49 = vst.msk [vmem:[#allocation5 + $0x38] sm:$0xff] %vm41, %v32
    %50 = vst.msk [vmem:[#allocation5 + $0x40] sm:$0xff] %vm41, %v33
    %51 = vst.msk [vmem:[#allocation5 + $0x48] sm:$0xff] %vm41, %v34
    %52 = vst.msk [vmem:[#allocation5 + $0x50] sm:$0xff] %vm41, %v35
    %53 = vst.msk [vmem:[#allocation5 + $0x58] sm:$0xff] %vm41, %v36
    %54 = vst.msk [vmem:[#allocation5 + $0x60] sm:$0xff] %vm41, %v37
    %55 = vst.msk [vmem:[#allocation5 + $0x68] sm:$0xff] %vm41, %v38
    %56 = vst.msk [vmem:[#allocation5 + $0x70] sm:$0xff] %vm41, %v39
    %57 = vst.msk [vmem:[#allocation5 + $0x78] sm:$0xff] %vm41, %v40
    // Predicated region
    $region10: #{tpu_custom_call.1} parent=1 // pred_check
      _
    $region11: #{tpu_custom_call.1} parent=1 // pred_check_branch
      %59 = sbr.rel (0) target = $region13
    $region12: #{tpu_custom_call.1} parent=1 // pred_region
      %61 = vsyncadd [#allocation4], 0
      %s62 = sshll.u32 [#allocation5], 4
      %s63 = int_to_ptr.vmem [resolvable:$true] %s62
      %s64 = sshll.u32 %s1, 4
      %s65 = int_to_ptr.hbm [resolvable:$true] %s64
      %70 = dma.vmem_to_hbm [thread:$0]  %s63, 2048, %s65, [#allocation4], 128, 128, 8
    $region13: #{tpu_custom_call.1} parent=1 // pred_fallthru
      _
    // Predicated region
    $region14: #{tpu_custom_call.1} parent=1 // pred_check
      _
    $region15: #{tpu_custom_call.1} parent=1 // pred_check_branch
      %72 = sbr.rel (0) target = $region17
    $region16: #{tpu_custom_call.1} parent=1 // pred_region
      %74 = dma.done [#allocation4], 2048
    $region17: #{tpu_custom_call.1} parent=1 // pred_fallthru
      _
    %75 = vsyncpa [#allocation3], 1
    %76 = vsyncpa [#allocation4], 1

</llo_original>
